<compile_context>
chip_gen: v5e
topology: v5e:2x2
jax: 0.10.0
libtpu: 0.0.40
codegen_flags: <defaults>
</compile_context>

<pallas_src>
import jax
import jax.numpy as jnp
from jax.experimental import pallas as pl
from jax.experimental.pallas import tpu as pltpu


def _round_up(x, m):
    return (x + m - 1) // m * m


def _predictor_kernel(x_ref, w_ref, b_ref, out_ref):
    # Cast x to the MXU compute dtype INSIDE the kernel (no extra XLA pass
    # over x in the wrapper); one fused MXU matmul for both heads, f32
    # accumulation, f32 bias added in the epilogue.
    x = x_ref[...].astype(w_ref.dtype)
    acc = jnp.dot(x, w_ref[...], preferred_element_type=jnp.float32)
    out_ref[...] = (acc + b_ref[...]).astype(out_ref.dtype)


def prepare_fast_rcnn_params(w_cls, b_cls, w_bbox, b_bbox,
                             compute_dtype=jnp.bfloat16):
    """One-time parameter prep (call once, reuse across forward passes).

    Transposes the PyTorch-layout weights to (C, out), fuses the two heads
    along the output dim, and zero-pads the fused lane dim (128 for bf16,
    256 for the f32 parity path) so the kernel stores a lane-dense slab.
    """
    num_classes, _ = w_cls.shape
    num_bbox = w_bbox.shape[0]
    out = num_classes + num_bbox
    lane_mult = 256 if jnp.dtype(compute_dtype).itemsize == 4 else 128
    out_padded = max(lane_mult, _round_up(out, lane_mult))

    w = jnp.concatenate([jnp.asarray(w_cls).T, jnp.asarray(w_bbox).T], axis=1)
    b = jnp.concatenate(
        [jnp.asarray(b_cls), jnp.asarray(b_bbox)]).reshape(1, out)
    pad = out_padded - out
    if pad:
        w = jnp.pad(w, ((0, 0), (0, pad)))   # zero cols -> no cross-head leakage
        b = jnp.pad(b, ((0, 0), (0, pad)))
    return {
        "w": w.astype(compute_dtype),        # (C, out_padded), MXU-native dtype
        "b": b.astype(jnp.float32),          # (1, out_padded), f32 bias
        "num_classes": int(num_classes),
        "num_bbox": int(num_bbox),
        "compute_dtype": compute_dtype,
    }


def fast_rcnn_predictor(x, params, *, tm=512, out_dtype=None,
                        return_fused=False):
    """x: (N, C). params: output of prepare_fast_rcnn_params.

    Default: returns (scores (N, num_classes), bbox_deltas (N, num_classes*4)).
    With return_fused=True: returns (fused_slab (N, out_padded), num_classes,
    num_bbox) so the consumer can slice lazily (saves an HBM pass).
    """
    # TODO(synk): original forward calls torch.flatten on 4-D input without
    # assigning the result -> flatten is a no-op; only the 2-D ROI-feature
    # path (N, in_channels) is implemented.
    n, c = x.shape
    out_dtype = x.dtype if out_dtype is None else out_dtype

    w = params["w"]
    b = params["b"]
    num_classes = params["num_classes"]
    num_bbox = params["num_bbox"]
    out_padded = w.shape[1]

    if n == 0:  # empty ROI batch -> no kernel launch, no zero-size grid
        if return_fused:
            return jnp.zeros((0, out_padded), out_dtype), num_classes, num_bbox
        return (jnp.zeros((0, num_classes), out_dtype),
                jnp.zeros((0, num_bbox), out_dtype))

    x_item = jnp.dtype(x.dtype).itemsize
    w_item = jnp.dtype(w.dtype).itemsize
    o_item = jnp.dtype(out_dtype).itemsize

    # ---- tile-size selection -------------------------------------------
    # Sublane multiple: 16 keeps bf16 tiles fully packed; 8 for f32 / tiny N.
    mult = 16 if (w_item == 2 and n >= 16) else 8
    tm = max(mult, min(tm, _round_up(n, mult)))
    # Keep >= 2 grid steps when there is enough work so v7x's second
    # TensorCore is not idle (grid axis is "parallel").
    if n > mult:
        tm = min(tm, _round_up(-(-n // 2), mult))

    # Cap the tile from a conservative VMEM budget (v7x: 64 MiB physical).
    def _tile_bytes(tm_):
        return (2 * tm_ * c * x_item              # x tile, double-buffered
                + 2 * c * out_padded * w_item     # fused weights (resident)
                + 2 * out_padded * 4              # fused bias
                + 2 * tm_ * out_padded * o_item)  # output tile, double-buffered

    vmem_budget = 40 * 1024 * 1024
    while tm > mult and _tile_bytes(tm) > vmem_budget:
        tm = max(mult, _round_up(tm // 2, mult))
    # TODO(synk): if in_channels ever grows so large that a single (tm, C)
    # tile cannot fit, add a K grid axis ("arbitrary", last) with an f32
    # VMEM accumulator instead of shrinking tm further.

    grid = (pl.cdiv(n, tm),)

    cost = pl.CostEstimate(
        flops=2 * n * c * out_padded,
        transcendentals=0,
        bytes_accessed=(n * c * x_item
                        + c * out_padded * w_item
                        + out_padded * 4
                        + n * out_padded * o_item),
    )

    fused = pl.pallas_call(
        _predictor_kernel,
        out_shape=jax.ShapeDtypeStruct((n, out_padded), out_dtype),
        grid=grid,
        in_specs=[
            pl.BlockSpec((tm, c), lambda i: (i, 0)),            # ROI tile
            pl.BlockSpec((c, out_padded), lambda i: (0, 0)),    # fused weights
            pl.BlockSpec((1, out_padded), lambda i: (0, 0)),    # fused bias
        ],
        out_specs=pl.BlockSpec((tm, out_padded), lambda i: (i, 0)),
        compiler_params=pltpu.CompilerParams(
            dimension_semantics=("parallel",),
            vmem_limit_bytes=min(max(32 << 20, _tile_bytes(tm) + (4 << 20)),
                                 56 << 20),
        ),
        cost_estimate=cost,
    )(x, w, b)

    if return_fused:
        return fused, num_classes, num_bbox

    # Lane-only slices (no row slice since N was never padded); lax.slice can
    # fuse into downstream consumers.
    scores = jax.lax.slice(fused, (0, 0), (n, num_classes))
    bbox_deltas = jax.lax.slice(fused, (0, num_classes),
                                (n, num_classes + num_bbox))
    return scores, bbox_deltas


def _init_linear_params(key, out_features, in_features):
    # Deterministic PyTorch-style default init: U(-1/sqrt(in), 1/sqrt(in)).
    kw, kb = jax.random.split(key)
    bound = 1.0 / jnp.sqrt(jnp.float32(in_features))
    w = jax.random.uniform(kw, (out_features, in_features), jnp.float32,
                           -bound, bound)
    b = jax.random.uniform(kb, (out_features,), jnp.float32, -bound, bound)
    return w, b


if __name__ == "__main__":
    in_channels = 32
    num_classes = 8
    num_rois = 8

    key = jax.random.PRNGKey(0)
    kx, kc, kb = jax.random.split(key, 3)

    x = jax.random.normal(kx, (num_rois, in_channels), jnp.float32)
    w_cls, b_cls = _init_linear_params(kc, num_classes, in_channels)
    w_bbox, b_bbox = _init_linear_params(kb, num_classes * 4, in_channels)

    # Plain JAX reference.
    scores_ref = x @ w_cls.T + b_cls
    bbox_ref = x @ w_bbox.T + b_bbox

    # f32 compute path: exact parity with the PyTorch module.
    params_f32 = prepare_fast_rcnn_params(w_cls, b_cls, w_bbox, b_bbox,
                                          compute_dtype=jnp.float32)
    scores, bbox_deltas = fast_rcnn_predictor(x, params_f32)
    jax.block_until_ready((scores, bbox_deltas))
    assert scores.shape == (num_rois, num_classes)
    assert bbox_deltas.shape == (num_rois, num_classes * 4)
    assert jnp.allclose(scores, scores_ref, atol=1e-5)
    assert jnp.allclose(bbox_deltas, bbox_ref, atol=1e-5)

    # bf16 default path (MXU-native on v5e/v6e/v7x, f32 accumulation).
    params_bf16 = prepare_fast_rcnn_params(w_cls, b_cls, w_bbox, b_bbox)
    s16, bb16 = fast_rcnn_predictor(x, params_bf16)
    jax.block_until_ready((s16, bb16))
    assert jnp.allclose(s16, scores_ref, atol=5e-2)
    assert jnp.allclose(bb16, bbox_ref, atol=5e-2)

    # Ragged-N path: N not a multiple of the tile, handled without any
    # wrapper-side padding of x.
    x_odd = jax.random.normal(kx, (13, in_channels), jnp.float32)
    s_odd, b_odd = fast_rcnn_predictor(x_odd, params_f32)
    jax.block_until_ready((s_odd, b_odd))
    assert s_odd.shape == (13, num_classes)
    assert b_odd.shape == (13, num_classes * 4)
    assert jnp.allclose(s_odd, x_odd @ w_cls.T + b_cls, atol=1e-5)
    assert jnp.allclose(b_odd, x_odd @ w_bbox.T + b_bbox, atol=1e-5)

    print("KERNEL_OK")
</pallas_src>

<mosaic_0001>
module attributes {stable_mosaic.version = 11 : i64} {
  func.func @_predictor_kernel(%arg0: i32, %arg1: memref<8x32xf32, #tpu.memory_space<vmem>>, %arg2: memref<32x256xf32, #tpu.memory_space<vmem>>, %arg3: memref<1x256xf32, #tpu.memory_space<vmem>>, %arg4: memref<8x256xf32, #tpu.memory_space<vmem>>) attributes {dimension_semantics = [#tpu.dimension_semantics<parallel>], iteration_bounds = array<i64: 1>, scalar_prefetch = 0 : i64, scratch_operands = 0 : i64, tpu.core_type = #tpu.core_type<tc>, window_params = [{transform_indices = @transform_0, window_bounds = array<i64: 8, 32>}, {pipeline_mode = #tpu.pipeline_mode<synchronous>, transform_indices = @transform_1, window_bounds = array<i64: 32, 256>}, {pipeline_mode = #tpu.pipeline_mode<synchronous>, transform_indices = @transform_2, window_bounds = array<i64: 1, 256>}, {transform_indices = @transform_3, window_bounds = array<i64: 8, 256>}]} {
    %c0 = arith.constant 0 : index
    %c0_0 = arith.constant 0 : index
    %0 = vector.load %arg1[%c0, %c0_0] : memref<8x32xf32, #tpu.memory_space<vmem>>, vector<8x32xf32>
    %c0_1 = arith.constant 0 : index
    %c0_2 = arith.constant 0 : index
    %1 = vector.load %arg2[%c0_1, %c0_2] : memref<32x256xf32, #tpu.memory_space<vmem>>, vector<32x256xf32>
    %cst = arith.constant dense<0.000000e+00> : vector<8x256xf32>
    %2 = tpu.matmul %0, %1, %cst {dimension_numbers = #tpu.dot_dimension_numbers<[1], [0], [0], [1], [0, 0, 1, 1], [], []>} : vector<8x32xf32>, vector<32x256xf32>, vector<8x256xf32> -> vector<8x256xf32>
    %c0_3 = arith.constant 0 : index
    %c0_4 = arith.constant 0 : index
    %3 = vector.load %arg3[%c0_3, %c0_4] : memref<1x256xf32, #tpu.memory_space<vmem>>, vector<1x256xf32>
    %4 = vector.broadcast %3 : vector<1x256xf32> to vector<8x256xf32>
    %5 = arith.addf %2, %4 : vector<8x256xf32>
    %c0_5 = arith.constant 0 : index
    %c0_6 = arith.constant 0 : index
    %6 = vector.load %arg4[%c0_5, %c0_6] : memref<8x256xf32, #tpu.memory_space<vmem>>, vector<8x256xf32>
    tpu.vector_store %arg4[%c0_5, %c0_6], %5 {strides = array<i32>} : memref<8x256xf32, #tpu.memory_space<vmem>>, vector<8x256xf32>,
    return
  }
  func.func @transform_0(%arg0: i32) -> (i32, i32) {
    %c0_i32 = arith.constant 0 : i32
    %c0_i32_0 = arith.constant 0 : i32
    return %arg0, %c0_i32 : i32, i32
  }
  func.func @transform_1(%arg0: i32) -> (i32, i32) {
    %c0_i32 = arith.constant 0 : i32
    %c0_i32_0 = arith.constant 0 : i32
    %c0_i32_1 = arith.constant 0 : i32
    return %c0_i32, %c0_i32_0 : i32, i32
  }
  func.func @transform_2(%arg0: i32) -> (i32, i32) {
    %c0_i32 = arith.constant 0 : i32
    %c0_i32_0 = arith.constant 0 : i32
    %c0_i32_1 = arith.constant 0 : i32
    return %c0_i32, %c0_i32_0 : i32, i32
  }
  func.func @transform_3(%arg0: i32) -> (i32, i32) {
    %c0_i32 = arith.constant 0 : i32
    %c0_i32_0 = arith.constant 0 : i32
    return %arg0, %c0_i32 : i32, i32
  }
}

</mosaic_0001>

<llo_original>
// kernel: tpu_custom_call.1
$region0: #{tpu_custom_call.1}
  #allocation0 [shape = 'u32[]', space=smem, size = 0x4, offset = 0x4, fixed_abs, tag = 'smem constant byte address 0x4 - core index']
  #allocation1 [shape = 'u32[72,128]{1,0:T(1,128)}', space=vmem, size = 0x9000, scoped, tag = 'internal scratch']
  %s0 = inlined_call_operand.hbm [shape: f32[8,32], index: 0, kind: input, shape index: {}]
  %s1 = inlined_call_operand.hbm [shape: f32[32,256], index: 1, kind: input, shape index: {}]
  %s2 = inlined_call_operand.hbm [shape: f32[1,256], index: 2, kind: input, shape index: {}]
  %s3 = inlined_call_operand.hbm [shape: f32[8,256], index: 3, kind: output, shape index: {}]
  %s4 = sld [smem:[#allocation0]]
  $region34: #{tpu_custom_call.1} parent=0
    _
  %s6 = ssub.s32 1, %s4
  %s7 = scalar_select 0, %s6, %s4
  $region1: #{tpu_custom_call.1} parent=0
    #allocation2 [shape = 'u8[4096]{0}', space=vmem, size = 0x1000, scoped, tag = 'input window, operand 0, single buffered']
    #allocation3 [shape = 's32[1]{0}', space=sflag, size = 0x4, scoped, tag = 'scoped memory for tpu_custom_call.1']
    #allocation4 [shape = 's32[1]{0}', space=sflag, size = 0x4, scoped, tag = 'scoped memory for tpu_custom_call.1']
    #allocation5 [shape = 'u8[32768]{0}', space=vmem, size = 0x8000, scoped, tag = 'input window, operand 1, single buffered']
    #allocation6 [shape = 's32[1]{0}', space=sflag, size = 0x4, scoped, tag = 'scoped memory for tpu_custom_call.1']
    #allocation7 [shape = 'u8[1024]{0}', space=vmem, size = 0x400, scoped, tag = 'input window, operand 2, single buffered']
    #allocation8 [shape = 'u8[8192]{0}', space=vmem, size = 0x2000, scoped, tag = 'output window, operand 0, single buffered']
    %8 = vsyncpa [#allocation3], 0
    %9 = vsyncpa [#allocation6], 0
    %10 = vsyncpa [#allocation4], 0
    // Predicated region
    $region2: #{tpu_custom_call.1} parent=1 // pred_check
      _
    $region3: #{tpu_custom_call.1} parent=1 // pred_check_branch
      %12 = sbr.rel (0) target = $region5
    $region4: #{tpu_custom_call.1} parent=1 // pred_region
      %14 = vsyncadd [#allocation3], 0
      %s16 = sshll.u32 %s0, 4
      %s17 = int_to_ptr.hbm [resolvable:$true] %s16
      %s18 = sshll.u32 [#allocation2], 4
      %s19 = int_to_ptr.vmem [resolvable:$true] %s18
      %21 = dma.hbm_to_vmem [thread:$0]  %s17, 128, %s19, [#allocation3]
    $region5: #{tpu_custom_call.1} parent=1 // pred_fallthru
      _
    // Predicated region
    $region6: #{tpu_custom_call.1} parent=1 // pred_check
      _
    $region7: #{tpu_custom_call.1} parent=1 // pred_check_branch
      %23 = sbr.rel (0) target = $region9
    $region8: #{tpu_custom_call.1} parent=1 // pred_region
      %25 = vsyncadd [#allocation6], 0
      %s26 = sshll.u32 %s1, 4
      %s27 = int_to_ptr.hbm [resolvable:$true] %s26
      %s28 = sshll.u32 [#allocation5], 4
      %s29 = int_to_ptr.vmem [resolvable:$true] %s28
      %34 = dma.hbm_to_vmem [thread:$0]  %s27, 1024, %s29, [#allocation6], 256, 256, 16
    $region9: #{tpu_custom_call.1} parent=1 // pred_fallthru
      _
    // Predicated region
    $region10: #{tpu_custom_call.1} parent=1 // pred_check
      _
    $region11: #{tpu_custom_call.1} parent=1 // pred_check_branch
      %36 = sbr.rel (0) target = $region13
    $region12: #{tpu_custom_call.1} parent=1 // pred_region
      %38 = vsyncadd [#allocation6], 0
      %s40 = sshll.u32 %s2, 4
      %s41 = int_to_ptr.hbm [resolvable:$true] %s40
      %s42 = sshll.u32 [#allocation7], 4
      %s43 = int_to_ptr.vmem [resolvable:$true] %s42
      %45 = dma.hbm_to_vmem [thread:$0]  %s41, 32, %s43, [#allocation6]
    $region13: #{tpu_custom_call.1} parent=1 // pred_fallthru
      _
    // Predicated region
    $region14: #{tpu_custom_call.1} parent=1 // pred_check
      _
    $region15: #{tpu_custom_call.1} parent=1 // pred_check_branch
      %47 = sbr.rel (0) target = $region17
    $region16: #{tpu_custom_call.1} parent=1 // pred_region
      %49 = dma.done [#allocation3], 128
    $region17: #{tpu_custom_call.1} parent=1 // pred_fallthru
      _
    // Predicated region
    $region18: #{tpu_custom_call.1} parent=1 // pred_check
      _
    $region19: #{tpu_custom_call.1} parent=1 // pred_check_branch
      %51 = sbr.rel (0) target = $region21
    $region20: #{tpu_custom_call.1} parent=1 // pred_region
      %53 = dma.done [#allocation6], 1024
    $region21: #{tpu_custom_call.1} parent=1 // pred_fallthru
      _
    // Predicated region
    $region22: #{tpu_custom_call.1} parent=1 // pred_check
      _
    $region23: #{tpu_custom_call.1} parent=1 // pred_check_branch
      %55 = sbr.rel (0) target = $region25
    $region24: #{tpu_custom_call.1} parent=1 // pred_region
      %57 = dma.done [#allocation6], 32
    $region25: #{tpu_custom_call.1} parent=1 // pred_fallthru
      _
    %v58 = vld [vmem:[#allocation2] sm:$0xff]
    %v59 = vld [vmem:[#allocation5] sm:$0xff]
    %v60 = vld [vmem:[#allocation5 + $0x8] sm:$0xff]
    %v61 = vld [vmem:[#allocation5 + $0x10] sm:$0xff]
    %v62 = vld [vmem:[#allocation5 + $0x18] sm:$0xff]
    %v63 = vld [vmem:[#allocation5 + $0x20] sm:$0xff]
    %v64 = vld [vmem:[#allocation5 + $0x28] sm:$0xff]
    %v65 = vld [vmem:[#allocation5 + $0x30] sm:$0xff]
    %v66 = vld [vmem:[#allocation5 + $0x38] sm:$0xff]
    %v67 = vld [vmem:[#allocation7] sm:$0x3]
    %v69 = vperm.slane %v67, 0
    %v70 = vperm.slane %v67, 1
    %vm73 = vcmask 261120
    %v75 = vsel %vm73, %v58, 0
    %77 = vmatpush.msra.mxu0 0.0
    %78 = vmatpush.msra.mxu0 0.0
    %79 = vmatpush.msra.mxu0 0.0
    %80 = vmatpush.msra.mxu0 0.0
    %81 = vmatpush.msra.mxu0 0.0
    %82 = vmatpush.msra.mxu0 0.0
    %83 = vmatpush.msra.mxu0 0.0
    %84 = vmatpush.msra.mxu0 0.0
    %85 = vmatpush.msra.mxu0 0.0
    %86 = vmatpush.msra.mxu0 0.0
    %87 = vmatpush.msra.mxu0 0.0
    %88 = vmatpush.msra.mxu0 0.0
    %89 = vmatpush.msra.mxu0 %v65
    %90 = vmatpush.msra.mxu0 %v63
    %91 = vmatpush.msra.mxu0 %v61
    %92 = vmatpush.msra.mxu0 %v59
    %93 = vmatmul.f32.gmra.mxu0 %v75
    %v94 = vpop.f32.mrf.mxu0
    %v95 = vadd.f32 %v69, %v94
    %96 = vdwg.mxu0
    %97 = vmatpush.msra.mxu0 0.0
    %98 = vmatpush.msra.mxu0 0.0
    %99 = vmatpush.msra.mxu0 0.0
    %100 = vmatpush.msra.mxu0 0.0
    %101 = vmatpush.msra.mxu0 0.0
    %102 = vmatpush.msra.mxu0 0.0
    %103 = vmatpush.msra.mxu0 0.0
    %104 = vmatpush.msra.mxu0 0.0
    %105 = vmatpush.msra.mxu0 0.0
    %106 = vmatpush.msra.mxu0 0.0
    %107 = vmatpush.msra.mxu0 0.0
    %108 = vmatpush.msra.mxu0 0.0
    %109 = vmatpush.msra.mxu0 %v66
    %110 = vmatpush.msra.mxu0 %v64
    %111 = vmatpush.msra.mxu0 %v62
    %112 = vmatpush.msra.mxu0 %v60
    %113 = vmatmul.f32.gmra.mxu0 %v75
    %v114 = vpop.f32.mrf.mxu0
    %v115 = vadd.f32 %v70, %v114
    %116 = vdwg.mxu0
    %117 = vst [vmem:[#allocation8] sm:$0xff] %v95
    %118 = vst [vmem:[#allocation8 + $0x8] sm:$0xff] %v115
    // Predicated region
    $region26: #{tpu_custom_call.1} parent=1 // pred_check
      _
    $region27: #{tpu_custom_call.1} parent=1 // pred_check_branch
      %120 = sbr.rel (0) target = $region29
    $region28: #{tpu_custom_call.1} parent=1 // pred_region
      %122 = vsyncadd [#allocation4], 0
      %s124 = sshll.u32 [#allocation8], 4
      %s125 = int_to_ptr.vmem [resolvable:$true] %s124
      %s126 = sshll.u32 %s3, 4
      %s127 = int_to_ptr.hbm [resolvable:$true] %s126
      %129 = dma.vmem_to_hbm [thread:$0]  %s125, 256, %s127, [#allocation4]
    $region29: #{tpu_custom_call.1} parent=1 // pred_fallthru
      _
    // Predicated region
    $region30: #{tpu_custom_call.1} parent=1 // pred_check
      _
    $region31: #{tpu_custom_call.1} parent=1 // pred_check_branch
      %131 = sbr.rel (0) target = $region33
    $region32: #{tpu_custom_call.1} parent=1 // pred_region
      %133 = dma.done [#allocation4], 256
    $region33: #{tpu_custom_call.1} parent=1 // pred_fallthru
      _
    %134 = vsyncpa [#allocation3], 1
    %135 = vsyncpa [#allocation6], 1
    %136 = vsyncpa [#allocation4], 1

</llo_original>
